<compile_context>
chip_gen: v5e
topology: v5e:2x2
jax: 0.10.0
libtpu: 0.0.40
codegen_flags: <defaults>
</compile_context>

<pallas_src>
import jax
import jax.numpy as jnp
from jax.experimental import pallas as pl
from jax.experimental.pallas import tpu as pltpu

EPS = 1e-5


def _batchnorm_train(h, gamma, beta):
    # BatchNorm1d, training mode, one-pass statistics:
    #   mu = E[h], var = E[h^2] - mu^2  (biased variance, clamped for safety).
    mu = jnp.mean(h, axis=0, keepdims=True)
    ex2 = jnp.mean(h * h, axis=0, keepdims=True)
    var = jnp.maximum(ex2 - mu * mu, 0.0)
    return (h - mu) * jax.lax.rsqrt(var + EPS) * gamma + beta


def dueling_dqn_kernel(x_ref, w_ref, vec_ref, q_ref):
    x = x_ref[...]
    vec = vec_ref[...]  # (8, 128) packed per-channel params (zero-padded lanes)

    in_pad = x_ref.shape[1]        # padded input width (multiple of 8)
    n_out = q_ref.shape[1]

    # Static sublane slices into the packed weight slab (all 128 lanes wide).
    w1 = w_ref[0:in_pad, :]                         # (in_pad, 128)
    w2 = w_ref[in_pad:in_pad + 128, :]              # (128, 128)  cols 64: zero
    wh1 = w_ref[in_pad + 128:in_pad + 256, :]       # (128, 128)  rows/cols 64: zero
    wh2 = w_ref[in_pad + 256:in_pad + 384, :]       # (128, 128)  block-diag + mean col

    # Static slices into the packed vector buffer (pad lanes are exact zeros).
    b1 = vec[0:1, :]
    g1 = vec[1:2, :]
    be1 = vec[2:3, :]
    b2 = vec[3:4, :]
    g2 = vec[4:5, :]
    be2 = vec[5:6, :]
    bh1 = vec[6:7, :]           # fused [bv1 | ba1 | 0...]
    bh2 = vec[7:8, :]           # fused [bv2 | ba2 | mean(ba2) | 0...]

    # --- feature layer ---
    h1 = jnp.dot(x, w1, preferred_element_type=jnp.float32) + b1
    h1 = jnp.maximum(_batchnorm_train(h1, g1, be1), 0.0)

    h2 = jnp.dot(h1, w2, preferred_element_type=jnp.float32) + b2
    h2 = jnp.maximum(_batchnorm_train(h2, g2, be2), 0.0)   # lanes 64: stay zero

    # --- fused heads, hidden layer: lanes [:32] value, [32:64] advantage ---
    hh = jnp.maximum(
        jnp.dot(h2, wh1, preferred_element_type=jnp.float32) + bh1, 0.0)

    # --- fused heads, output layer (block-diagonal + folded mean column) ---
    # lane 0 = value, lanes 1:1+out = advantages, lane 1+out = adv mean.
    vq = jnp.dot(hh, wh2, preferred_element_type=jnp.float32) + bh2

    value = vq[:, 0:1]
    adv = vq[:, 1:1 + n_out]
    adv_mean = vq[:, 1 + n_out:2 + n_out]
    q_ref[...] = value + (adv - adv_mean)


def init_params(key, input_dim, output_dim):
    """Deterministic synthetic parameters (PyTorch-Linear-shaped, pre-transposed)."""
    def linear(k, fan_in, fan_out):
        k1, k2 = jax.random.split(k)
        bound = 1.0 / jnp.sqrt(fan_in)
        w = jax.random.uniform(k1, (fan_in, fan_out), jnp.float32, -bound, bound)
        b = jax.random.uniform(k2, (1, fan_out), jnp.float32, -bound, bound)
        return w, b

    keys = jax.random.split(key, 6)
    w1, b1 = linear(keys[0], input_dim, 128)
    w2, b2 = linear(keys[1], 128, 64)
    wv1, bv1 = linear(keys[2], 64, 32)
    wv2, bv2 = linear(keys[3], 32, 1)
    wa1, ba1 = linear(keys[4], 64, 32)
    wa2, ba2 = linear(keys[5], 32, output_dim)

    # BatchNorm affine params (PyTorch default init: gamma=1, beta=0).
    g1, be1 = jnp.ones((1, 128), jnp.float32), jnp.zeros((1, 128), jnp.float32)
    g2, be2 = jnp.ones((1, 64), jnp.float32), jnp.zeros((1, 64), jnp.float32)

    return (w1, b1, g1, be1, w2, b2, g2, be2,
            wv1, bv1, wv2, bv2, wa1, ba1, wa2, ba2)


def pack_params(params, input_dim, output_dim):
    """Fuse heads, fold the advantage mean, and pack everything into
    one (in_pad + 384, 128) weight slab plus one (8, 128) vector tile."""
    (w1, b1, g1, be1, w2, b2, g2, be2,
     wv1, bv1, wv2, bv2, wa1, ba1, wa2, ba2) = params

    in_pad = ((input_dim + 7) // 8) * 8

    def pad_lanes(v):
        return jnp.pad(v, ((0, 0), (0, 128 - v.shape[1])))

    # w1: (input_dim, 128) -> (in_pad, 128); padded rows are zeros and are
    # matched by zero-padded x columns in the wrapper.
    w1p = jnp.pad(w1, ((0, in_pad - input_dim), (0, 0)))

    # w2: (128, 64) -> (128, 128); padded lanes keep h2[:, 64:] exactly zero.
    w2p = pad_lanes(w2)

    # Head hidden layers fused along the lane axis: (64, 64) -> (128, 128).
    w_h1 = jnp.concatenate([wv1, wa1], axis=1)                 # (64, 64)
    w_h1p = jnp.pad(w_h1, ((0, 64), (0, 64)))                  # (128, 128)

    # Head output layers fused block-diagonally + folded adv-mean column.
    w_h2 = jnp.zeros((64, 2 + output_dim), jnp.float32)
    w_h2 = w_h2.at[:32, 0:1].set(wv2)                          # value
    w_h2 = w_h2.at[32:, 1:1 + output_dim].set(wa2)             # advantages
    w_h2 = w_h2.at[32:, 1 + output_dim:2 + output_dim].set(
        jnp.mean(wa2, axis=1, keepdims=True))                  # adv mean
    w_h2p = jnp.pad(w_h2, ((0, 64), (0, 128 - (2 + output_dim))))   # (128, 128)

    slab = jnp.concatenate([w1p, w2p, w_h1p, w_h2p], axis=0)   # (in_pad+384, 128)

    b_h1 = jnp.concatenate([bv1, ba1], axis=1)                 # (1, 64)
    b_h2 = jnp.concatenate(
        [bv2, ba2, jnp.mean(ba2, axis=1, keepdims=True)], axis=1)   # (1, 2+out)

    vec = jnp.concatenate(
        [b1, g1, be1,
         pad_lanes(b2), pad_lanes(g2), pad_lanes(be2),
         pad_lanes(b_h1), pad_lanes(b_h2)],
        axis=0,
    )  # (8, 128)

    return slab, vec, in_pad


def dueling_dqn_forward(x, slab, vec, output_dim):
    B, d = x.shape
    in_pad = slab.shape[0] - 384
    if d < in_pad:
        x = jnp.pad(x, ((0, 0), (0, in_pad - d)))

    return pl.pallas_call(
        dueling_dqn_kernel,
        out_shape=jax.ShapeDtypeStruct((B, output_dim), jnp.float32),
        in_specs=[pl.BlockSpec(memory_space=pltpu.MemorySpace.VMEM)] * 3,
        out_specs=pl.BlockSpec(memory_space=pltpu.MemorySpace.VMEM),
    )(x, slab, vec)


def dueling_dqn_reference(x, params):
    (w1, b1, g1, be1, w2, b2, g2, be2,
     wv1, bv1, wv2, bv2, wa1, ba1, wa2, ba2) = params

    def bn(h, g, b):
        mu = jnp.mean(h, axis=0, keepdims=True)
        var = jnp.mean((h - mu) ** 2, axis=0, keepdims=True)
        return (h - mu) / jnp.sqrt(var + EPS) * g + b

    h = jnp.maximum(bn(x @ w1 + b1, g1, be1), 0.0)
    h = jnp.maximum(bn(h @ w2 + b2, g2, be2), 0.0)
    v = jnp.maximum(h @ wv1 + bv1, 0.0) @ wv2 + bv2
    a = jnp.maximum(h @ wa1 + ba1, 0.0) @ wa2 + ba2
    return v + (a - jnp.mean(a, axis=1, keepdims=True))


if __name__ == "__main__":
    # B=128: fold many env steps / replay rows into one call to amortize the
    # ~micro-second launch + DMA overhead (same MXU-pass count as B=8).
    B, INPUT_DIM, OUTPUT_DIM = 128, 32, 8

    key = jax.random.PRNGKey(0)
    k_x, k_p = jax.random.split(key)
    x = jax.random.normal(k_x, (B, INPUT_DIM), dtype=jnp.float32)
    params = init_params(k_p, INPUT_DIM, OUTPUT_DIM)
    slab, vec, _ = pack_params(params, INPUT_DIM, OUTPUT_DIM)

    q = dueling_dqn_forward(x, slab, vec, OUTPUT_DIM)
    q = jax.block_until_ready(q)

    q_ref = dueling_dqn_reference(x, params)
    assert q.shape == (B, OUTPUT_DIM)
    assert jnp.allclose(q, q_ref, atol=1e-4, rtol=1e-4)

    print("KERNEL_OK")
</pallas_src>

<mosaic_0001>
module attributes {stable_mosaic.version = 11 : i64} {
  func.func @dueling_dqn_kernel(%arg0: memref<128x32xf32, #tpu.memory_space<vmem>>, %arg1: memref<416x128xf32, #tpu.memory_space<vmem>>, %arg2: memref<8x128xf32, #tpu.memory_space<vmem>>, %arg3: memref<128x8xf32, #tpu.memory_space<vmem>>) attributes {dimension_semantics = [], scalar_prefetch = 0 : i64, scratch_operands = 0 : i64, tpu.core_type = #tpu.core_type<tc>} {
    %c0 = arith.constant 0 : index
    %c0_0 = arith.constant 0 : index
    %0 = vector.load %arg0[%c0, %c0_0] : memref<128x32xf32, #tpu.memory_space<vmem>>, vector<128x32xf32>
    %c0_1 = arith.constant 0 : index
    %c0_2 = arith.constant 0 : index
    %1 = vector.load %arg2[%c0_1, %c0_2] : memref<8x128xf32, #tpu.memory_space<vmem>>, vector<8x128xf32>
    %c0_3 = arith.constant 0 : index
    %c0_4 = arith.constant 0 : index
    %2 = vector.load %arg1[%c0_3, %c0_4] : memref<416x128xf32, #tpu.memory_space<vmem>>, vector<32x128xf32>
    %c32 = arith.constant 32 : index
    %c0_5 = arith.constant 0 : index
    %3 = vector.load %arg1[%c32, %c0_5] : memref<416x128xf32, #tpu.memory_space<vmem>>, vector<128x128xf32>
    %c160 = arith.constant 160 : index
    %c0_6 = arith.constant 0 : index
    %4 = vector.load %arg1[%c160, %c0_6] : memref<416x128xf32, #tpu.memory_space<vmem>>, vector<128x128xf32>
    %c288 = arith.constant 288 : index
    %c0_7 = arith.constant 0 : index
    %5 = vector.load %arg1[%c288, %c0_7] : memref<416x128xf32, #tpu.memory_space<vmem>>, vector<128x128xf32>
    %6 = vector.extract_strided_slice %1 {offsets = [0, 0], sizes = [1, 128], strides = [1, 1]} : vector<8x128xf32> to vector<1x128xf32>
    %7 = vector.extract_strided_slice %1 {offsets = [1, 0], sizes = [1, 128], strides = [1, 1]} : vector<8x128xf32> to vector<1x128xf32>
    %8 = vector.extract_strided_slice %1 {offsets = [2, 0], sizes = [1, 128], strides = [1, 1]} : vector<8x128xf32> to vector<1x128xf32>
    %9 = vector.extract_strided_slice %1 {offsets = [3, 0], sizes = [1, 128], strides = [1, 1]} : vector<8x128xf32> to vector<1x128xf32>
    %10 = vector.extract_strided_slice %1 {offsets = [4, 0], sizes = [1, 128], strides = [1, 1]} : vector<8x128xf32> to vector<1x128xf32>
    %11 = vector.extract_strided_slice %1 {offsets = [5, 0], sizes = [1, 128], strides = [1, 1]} : vector<8x128xf32> to vector<1x128xf32>
    %12 = vector.extract_strided_slice %1 {offsets = [6, 0], sizes = [1, 128], strides = [1, 1]} : vector<8x128xf32> to vector<1x128xf32>
    %13 = vector.extract_strided_slice %1 {offsets = [7, 0], sizes = [1, 128], strides = [1, 1]} : vector<8x128xf32> to vector<1x128xf32>
    %cst = arith.constant dense<0.000000e+00> : vector<128x128xf32>
    %14 = tpu.matmul %0, %2, %cst {dimension_numbers = #tpu.dot_dimension_numbers<[1], [0], [0], [1], [0, 0, 1, 1], [], []>} : vector<128x32xf32>, vector<32x128xf32>, vector<128x128xf32> -> vector<128x128xf32>
    %15 = vector.broadcast %6 : vector<1x128xf32> to vector<128x128xf32>
    %16 = arith.addf %14, %15 : vector<128x128xf32>
    %cst_8 = arith.constant dense<0.000000e+00> : vector<128xf32>
    %17 = vector.multi_reduction <add>, %16, %cst_8 [0] : vector<128x128xf32> to vector<128xf32>
    %18 = vector.shape_cast %17 : vector<128xf32> to vector<1x128xf32>
    %cst_9 = arith.constant 1.280000e+02 : f32
    %19 = vector.broadcast %cst_9 : f32 to vector<1x128xf32>
    %20 = arith.divf %18, %19 : vector<1x128xf32>
    %21 = arith.mulf %16, %16 : vector<128x128xf32>
    %cst_10 = arith.constant dense<0.000000e+00> : vector<128xf32>
    %22 = vector.multi_reduction <add>, %21, %cst_10 [0] : vector<128x128xf32> to vector<128xf32>
    %23 = vector.shape_cast %22 : vector<128xf32> to vector<1x128xf32>
    %cst_11 = arith.constant 1.280000e+02 : f32
    %24 = vector.broadcast %cst_11 : f32 to vector<1x128xf32>
    %25 = arith.divf %23, %24 : vector<1x128xf32>
    %26 = arith.mulf %20, %20 : vector<1x128xf32>
    %27 = arith.subf %25, %26 : vector<1x128xf32>
    %cst_12 = arith.constant 0.000000e+00 : f32
    %28 = vector.broadcast %cst_12 : f32 to vector<1x128xf32>
    %29 = arith.maximumf %27, %28 : vector<1x128xf32>
    %30 = vector.broadcast %20 : vector<1x128xf32> to vector<128x128xf32>
    %31 = arith.subf %16, %30 : vector<128x128xf32>
    %cst_13 = arith.constant 9.99999974E-6 : f32
    %32 = vector.broadcast %cst_13 : f32 to vector<1x128xf32>
    %33 = arith.addf %29, %32 : vector<1x128xf32>
    %34 = math.rsqrt %33 : vector<1x128xf32>
    %35 = vector.broadcast %34 : vector<1x128xf32> to vector<128x128xf32>
    %36 = arith.mulf %31, %35 : vector<128x128xf32>
    %37 = vector.broadcast %7 : vector<1x128xf32> to vector<128x128xf32>
    %38 = arith.mulf %36, %37 : vector<128x128xf32>
    %39 = vector.broadcast %8 : vector<1x128xf32> to vector<128x128xf32>
    %40 = arith.addf %38, %39 : vector<128x128xf32>
    %cst_14 = arith.constant 0.000000e+00 : f32
    %41 = vector.broadcast %cst_14 : f32 to vector<128x128xf32>
    %42 = arith.maximumf %40, %41 : vector<128x128xf32>
    %cst_15 = arith.constant dense<0.000000e+00> : vector<128x128xf32>
    %43 = tpu.matmul %42, %3, %cst_15 {dimension_numbers = #tpu.dot_dimension_numbers<[1], [0], [0], [1], [0, 0, 1, 1], [], []>} : vector<128x128xf32>, vector<128x128xf32>, vector<128x128xf32> -> vector<128x128xf32>
    %44 = vector.broadcast %9 : vector<1x128xf32> to vector<128x128xf32>
    %45 = arith.addf %43, %44 : vector<128x128xf32>
    %cst_16 = arith.constant dense<0.000000e+00> : vector<128xf32>
    %46 = vector.multi_reduction <add>, %45, %cst_16 [0] : vector<128x128xf32> to vector<128xf32>
    %47 = vector.shape_cast %46 : vector<128xf32> to vector<1x128xf32>
    %cst_17 = arith.constant 1.280000e+02 : f32
    %48 = vector.broadcast %cst_17 : f32 to vector<1x128xf32>
    %49 = arith.divf %47, %48 : vector<1x128xf32>
    %50 = arith.mulf %45, %45 : vector<128x128xf32>
    %cst_18 = arith.constant dense<0.000000e+00> : vector<128xf32>
    %51 = vector.multi_reduction <add>, %50, %cst_18 [0] : vector<128x128xf32> to vector<128xf32>
    %52 = vector.shape_cast %51 : vector<128xf32> to vector<1x128xf32>
    %cst_19 = arith.constant 1.280000e+02 : f32
    %53 = vector.broadcast %cst_19 : f32 to vector<1x128xf32>
    %54 = arith.divf %52, %53 : vector<1x128xf32>
    %55 = arith.mulf %49, %49 : vector<1x128xf32>
    %56 = arith.subf %54, %55 : vector<1x128xf32>
    %cst_20 = arith.constant 0.000000e+00 : f32
    %57 = vector.broadcast %cst_20 : f32 to vector<1x128xf32>
    %58 = arith.maximumf %56, %57 : vector<1x128xf32>
    %59 = vector.broadcast %49 : vector<1x128xf32> to vector<128x128xf32>
    %60 = arith.subf %45, %59 : vector<128x128xf32>
    %cst_21 = arith.constant 9.99999974E-6 : f32
    %61 = vector.broadcast %cst_21 : f32 to vector<1x128xf32>
    %62 = arith.addf %58, %61 : vector<1x128xf32>
    %63 = math.rsqrt %62 : vector<1x128xf32>
    %64 = vector.broadcast %63 : vector<1x128xf32> to vector<128x128xf32>
    %65 = arith.mulf %60, %64 : vector<128x128xf32>
    %66 = vector.broadcast %10 : vector<1x128xf32> to vector<128x128xf32>
    %67 = arith.mulf %65, %66 : vector<128x128xf32>
    %68 = vector.broadcast %11 : vector<1x128xf32> to vector<128x128xf32>
    %69 = arith.addf %67, %68 : vector<128x128xf32>
    %cst_22 = arith.constant 0.000000e+00 : f32
    %70 = vector.broadcast %cst_22 : f32 to vector<128x128xf32>
    %71 = arith.maximumf %69, %70 : vector<128x128xf32>
    %cst_23 = arith.constant dense<0.000000e+00> : vector<128x128xf32>
    %72 = tpu.matmul %71, %4, %cst_23 {dimension_numbers = #tpu.dot_dimension_numbers<[1], [0], [0], [1], [0, 0, 1, 1], [], []>} : vector<128x128xf32>, vector<128x128xf32>, vector<128x128xf32> -> vector<128x128xf32>
    %73 = vector.broadcast %12 : vector<1x128xf32> to vector<128x128xf32>
    %74 = arith.addf %72, %73 : vector<128x128xf32>
    %cst_24 = arith.constant 0.000000e+00 : f32
    %75 = vector.broadcast %cst_24 : f32 to vector<128x128xf32>
    %76 = arith.maximumf %74, %75 : vector<128x128xf32>
    %cst_25 = arith.constant dense<0.000000e+00> : vector<128x128xf32>
    %77 = tpu.matmul %76, %5, %cst_25 {dimension_numbers = #tpu.dot_dimension_numbers<[1], [0], [0], [1], [0, 0, 1, 1], [], []>} : vector<128x128xf32>, vector<128x128xf32>, vector<128x128xf32> -> vector<128x128xf32>
    %78 = vector.broadcast %13 : vector<1x128xf32> to vector<128x128xf32>
    %79 = arith.addf %77, %78 : vector<128x128xf32>
    %80 = vector.extract_strided_slice %79 {offsets = [0, 0], sizes = [128, 1], strides = [1, 1]} : vector<128x128xf32> to vector<128x1xf32>
    %81 = vector.extract_strided_slice %79 {offsets = [0, 1], sizes = [128, 8], strides = [1, 1]} : vector<128x128xf32> to vector<128x8xf32>
    %82 = vector.extract_strided_slice %79 {offsets = [0, 9], sizes = [128, 1], strides = [1, 1]} : vector<128x128xf32> to vector<128x1xf32>
    %83 = vector.broadcast %82 : vector<128x1xf32> to vector<128x8xf32>
    %84 = arith.subf %81, %83 : vector<128x8xf32>
    %85 = vector.broadcast %80 : vector<128x1xf32> to vector<128x8xf32>
    %86 = arith.addf %85, %84 : vector<128x8xf32>
    %c0_26 = arith.constant 0 : index
    %c0_27 = arith.constant 0 : index
    %87 = vector.load %arg3[%c0_26, %c0_27] : memref<128x8xf32, #tpu.memory_space<vmem>>, vector<128x8xf32>
    tpu.vector_store %arg3[%c0_26, %c0_27], %86 {strides = array<i32>} : memref<128x8xf32, #tpu.memory_space<vmem>>, vector<128x8xf32>,
    return
  }
}

</mosaic_0001>

<llo_original>
// kernel: tpu_custom_call.1
$region0: #{tpu_custom_call.1}
  #allocation0 [shape = 'u32[]', space=smem, size = 0x4, offset = 0x4, fixed_abs, tag = 'smem constant byte address 0x4 - core index']
  #allocation1 [shape = 'u32[72,128]{1,0:T(1,128)}', space=vmem, size = 0x9000, scoped, tag = 'internal scratch']
  %s0 = inlined_call_operand.vmem [shape: f32[128,32], index: 0, kind: input, shape index: {}]
  %s1 = inlined_call_operand.hbm [shape: f32[416,128], index: 1, kind: input, shape index: {}]
  %s2 = inlined_call_operand.vmem [shape: f32[8,128], index: 2, kind: input, shape index: {}]
  %s3 = inlined_call_operand.vmem [shape: f32[128,8], index: 3, kind: output, shape index: {}]
  %s4 = sld [smem:[#allocation0]]
  $region26: #{tpu_custom_call.1} parent=0
    _
  %s6 = ssub.s32 1, %s4
  %s7 = scalar_select 0, %s6, %s4
  $region1: #{tpu_custom_call.1} parent=0
    #allocation2 [shape = 'u8[212992]{0}', space=vmem, size = 0x34000, scoped, tag = 'input window, operand 1, single buffered']
    #allocation3 [shape = 's32[1]{0}', space=sflag, size = 0x4, scoped, tag = 'scoped memory for tpu_custom_call.1']
    %8 = vsyncpa [#allocation3], 0
    // Predicated region
    $region2: #{tpu_custom_call.1} parent=1 // pred_check
      _
    $region3: #{tpu_custom_call.1} parent=1 // pred_check_branch
      %10 = sbr.rel (0) target = $region5
    $region4: #{tpu_custom_call.1} parent=1 // pred_region
      _
    $region5: #{tpu_custom_call.1} parent=1 // pred_fallthru
      _
    // Predicated region
    $region6: #{tpu_custom_call.1} parent=1 // pred_check
      _
    $region7: #{tpu_custom_call.1} parent=1 // pred_check_branch
      %12 = sbr.rel (0) target = $region9
    $region8: #{tpu_custom_call.1} parent=1 // pred_region
      %14 = vsyncadd [#allocation3], 0
      %s15 = sshll.u32 %s1, 4
      %s16 = int_to_ptr.hbm [resolvable:$true] %s15
      %s17 = sshll.u32 [#allocation2], 4
      %s18 = int_to_ptr.vmem [resolvable:$true] %s17
      %23 = dma.hbm_to_vmem [thread:$0]  %s16, 6656, %s18, [#allocation3], 128, 128, 8
    $region9: #{tpu_custom_call.1} parent=1 // pred_fallthru
      _
    // Predicated region
    $region10: #{tpu_custom_call.1} parent=1 // pred_check
      _
    $region11: #{tpu_custom_call.1} parent=1 // pred_check_branch
      %25 = sbr.rel (0) target = $region13
    $region12: #{tpu_custom_call.1} parent=1 // pred_region
      _
    $region13: #{tpu_custom_call.1} parent=1 // pred_fallthru
      _
    // Predicated region
    $region14: #{tpu_custom_call.1} parent=1 // pred_check
      _
    $region15: #{tpu_custom_call.1} parent=1 // pred_check_branch
      %27 = sbr.rel (0) target = $region17
    $region16: #{tpu_custom_call.1} parent=1 // pred_region
      %29 = dma.done [#allocation3], 6656
    $region17: #{tpu_custom_call.1} parent=1 // pred_fallthru
      _
    %v30 = vld [vmem:[%s0] sm:$0xff]
    %v31 = vld [vmem:[%s0 + $0x8] sm:$0xff]
    %v32 = vld [vmem:[%s0 + $0x10] sm:$0xff]
    %v33 = vld [vmem:[%s0 + $0x18] sm:$0xff]
    %v34 = vld [vmem:[%s0 + $0x20] sm:$0xff]
    %v35 = vld [vmem:[%s0 + $0x28] sm:$0xff]
    %v36 = vld [vmem:[%s0 + $0x30] sm:$0xff]
    %v37 = vld [vmem:[%s0 + $0x38] sm:$0xff]
    %v38 = vld [vmem:[%s0 + $0x40] sm:$0xff]
    %v39 = vld [vmem:[%s0 + $0x48] sm:$0xff]
    %v40 = vld [vmem:[%s0 + $0x50] sm:$0xff]
    %v41 = vld [vmem:[%s0 + $0x58] sm:$0xff]
    %v42 = vld [vmem:[%s0 + $0x60] sm:$0xff]
    %v43 = vld [vmem:[%s0 + $0x68] sm:$0xff]
    %v44 = vld [vmem:[%s0 + $0x70] sm:$0xff]
    %v45 = vld [vmem:[%s0 + $0x78] sm:$0xff]
    %v46 = vld [vmem:[%s2] sm:$0xff]
    %v47 = vld [vmem:[#allocation2] sm:$0xff]
    %v48 = vld [vmem:[#allocation2 + $0x8] sm:$0xff]
    %v49 = vld [vmem:[#allocation2 + $0x10] sm:$0xff]
    %v50 = vld [vmem:[#allocation2 + $0x18] sm:$0xff]
    %v51 = vld [vmem:[#allocation2 + $0x20] sm:$0xff]
    %v52 = vld [vmem:[#allocation2 + $0x28] sm:$0xff]
    %v53 = vld [vmem:[#allocation2 + $0x30] sm:$0xff]
    %v54 = vld [vmem:[#allocation2 + $0x38] sm:$0xff]
    %v55 = vld [vmem:[#allocation2 + $0x40] sm:$0xff]
    %v56 = vld [vmem:[#allocation2 + $0x48] sm:$0xff]
    %v57 = vld [vmem:[#allocation2 + $0x50] sm:$0xff]
    %v58 = vld [vmem:[#allocation2 + $0x58] sm:$0xff]
    %v59 = vld [vmem:[#allocation2 + $0x60] sm:$0xff]
    %v60 = vld [vmem:[#allocation2 + $0x68] sm:$0xff]
    %v61 = vld [vmem:[#allocation2 + $0x70] sm:$0xff]
    %v62 = vld [vmem:[#allocation2 + $0x78] sm:$0xff]
    %v63 = vld [vmem:[#allocation2 + $0x80] sm:$0xff]
    %v64 = vld [vmem:[#allocation2 + $0x88] sm:$0xff]
    %v65 = vld [vmem:[#allocation2 + $0x90] sm:$0xff]
    %v66 = vld [vmem:[#allocation2 + $0x98] sm:$0xff]
    %v67 = vld [vmem:[#allocation2 + $0xa0] sm:$0xff]
    %v68 = vld [vmem:[#allocation2 + $0xa8] sm:$0xff]
    %v69 = vld [vmem:[#allocation2 + $0xb0] sm:$0xff]
    %v70 = vld [vmem:[#allocation2 + $0xb8] sm:$0xff]
    %v71 = vld [vmem:[#allocation2 + $0xc0] sm:$0xff]
    %v72 = vld [vmem:[#allocation2 + $0xc8] sm:$0xff]
    %v73 = vld [vmem:[#allocation2 + $0xd0] sm:$0xff]
    %v74 = vld [vmem:[#allocation2 + $0xd8] sm:$0xff]
    %v75 = vld [vmem:[#allocation2 + $0xe0] sm:$0xff]
    %v76 = vld [vmem:[#allocation2 + $0xe8] sm:$0xff]
    %v77 = vld [vmem:[#allocation2 + $0xf0] sm:$0xff]
    %v78 = vld [vmem:[#allocation2 + $0xf8] sm:$0xff]
    %v79 = vld [vmem:[#allocation2 + $0x100] sm:$0xff]
    %v80 = vld [vmem:[#allocation2 + $0x108] sm:$0xff]
    %v81 = vld [vmem:[#allocation2 + $0x110] sm:$0xff]
    %v82 = vld [vmem:[#allocation2 + $0x118] sm:$0xff]
    %v83 = vld [vmem:[#allocation2 + $0x120] sm:$0xff]
    %v84 = vld [vmem:[#allocation2 + $0x128] sm:$0xff]
    %v85 = vld [vmem:[#allocation2 + $0x130] sm:$0xff]
    %v86 = vld [vmem:[#allocation2 + $0x138] sm:$0xff]
    %v87 = vld [vmem:[#allocation2 + $0x140] sm:$0xff]
    %v88 = vld [vmem:[#allocation2 + $0x148] sm:$0xff]
    %v89 = vld [vmem:[#allocation2 + $0x150] sm:$0xff]
    %v90 = vld [vmem:[#allocation2 + $0x158] sm:$0xff]
    %v91 = vld [vmem:[#allocation2 + $0x160] sm:$0xff]
    %v92 = vld [vmem:[#allocation2 + $0x168] sm:$0xff]
    %v93 = vld [vmem:[#allocation2 + $0x170] sm:$0xff]
    %v94 = vld [vmem:[#allocation2 + $0x178] sm:$0xff]
    %v95 = vld [vmem:[#allocation2 + $0x180] sm:$0xff]
    %v96 = vld [vmem:[#allocation2 + $0x188] sm:$0xff]
    %v97 = vld [vmem:[#allocation2 + $0x190] sm:$0xff]
    %v98 = vld [vmem:[#allocation2 + $0x198] sm:$0xff]
    %v99 = vperm.slane %v46, 0
    %vm100 = vcmask 261120
    %v102 = vsel %vm100, %v30, 0
    %v105 = vsel %vm100, %v31, 0
    %v108 = vsel %vm100, %v32, 0
    %v111 = vsel %vm100, %v33, 0
    %v114 = vsel %vm100, %v34, 0
    %v117 = vsel %vm100, %v35, 0
    %v120 = vsel %vm100, %v36, 0
    %v123 = vsel %vm100, %v37, 0
    %v126 = vsel %vm100, %v38, 0
    %v129 = vsel %vm100, %v39, 0
    %v132 = vsel %vm100, %v40, 0
    %v135 = vsel %vm100, %v41, 0
    %v138 = vsel %vm100, %v42, 0
    %v141 = vsel %vm100, %v43, 0
    %v144 = vsel %vm100, %v44, 0
    %v147 = vsel %vm100, %v45, 0
    %149 = vmatpush.msra.mxu0 0.0
    %150 = vmatpush.msra.mxu0 0.0
    %151 = vmatpush.msra.mxu0 0.0
    %152 = vmatpush.msra.mxu0 0.0
    %153 = vmatpush.msra.mxu0 0.0
    %154 = vmatpush.msra.mxu0 0.0
    %155 = vmatpush.msra.mxu0 0.0
    %156 = vmatpush.msra.mxu0 0.0
    %157 = vmatpush.msra.mxu0 0.0
    %158 = vmatpush.msra.mxu0 0.0
    %159 = vmatpush.msra.mxu0 0.0
    %160 = vmatpush.msra.mxu0 0.0
    %161 = vmatpush.msra.mxu0 %v50
    %162 = vmatpush.msra.mxu0 %v49
    %163 = vmatpush.msra.mxu0 %v48
    %164 = vmatpush.msra.mxu0 %v47
    %165 = vmatmul.f32.gmra.mxu0 %v102
    %v166 = vpop.f32.mrf.mxu0
    %v167 = vadd.f32 %v99, %v166
    %168 = vmatmul.f32.gmra.mxu0 %v105
    %v169 = vpop.f32.mrf.mxu0
    %v170 = vadd.f32 %v99, %v169
    %171 = vmatmul.f32.gmra.mxu0 %v108
    %v172 = vpop.f32.mrf.mxu0
    %v173 = vadd.f32 %v99, %v172
    %174 = vmatmul.f32.gmra.mxu0 %v111
    %v175 = vpop.f32.mrf.mxu0
    %v176 = vadd.f32 %v99, %v175
    %177 = vmatmul.f32.gmra.mxu0 %v114
    %v178 = vpop.f32.mrf.mxu0
    %v179 = vadd.f32 %v99, %v178
    %180 = vmatmul.f32.gmra.mxu0 %v117
    %v181 = vpop.f32.mrf.mxu0
    %v182 = vadd.f32 %v99, %v181
    %183 = vmatmul.f32.gmra.mxu0 %v120
    %v184 = vpop.f32.mrf.mxu0
    %v185 = vadd.f32 %v99, %v184
    %186 = vmatmul.f32.gmra.mxu0 %v123
    %v187 = vpop.f32.mrf.mxu0
    %v188 = vadd.f32 %v99, %v187
    %189 = vmatmul.f32.gmra.mxu0 %v126
    %v190 = vpop.f32.mrf.mxu0
    %v191 = vadd.f32 %v99, %v190
    %192 = vmatmul.f32.gmra.mxu0 %v129
    %v193 = vpop.f32.mrf.mxu0
    %v194 = vadd.f32 %v99, %v193
    %195 = vmatmul.f32.gmra.mxu0 %v132
    %v196 = vpop.f32.mrf.mxu0
    %v197 = vadd.f32 %v99, %v196
    %198 = vmatmul.f32.gmra.mxu0 %v135
    %v199 = vpop.f32.mrf.mxu0
    %v200 = vadd.f32 %v99, %v199
    %201 = vmatmul.f32.gmra.mxu0 %v138
    %v202 = vpop.f32.mrf.mxu0
    %v203 = vadd.f32 %v99, %v202
    %204 = vmatmul.f32.gmra.mxu0 %v141
    %v205 = vpop.f32.mrf.mxu0
    %v206 = vadd.f32 %v99, %v205
    %207 = vmatmul.f32.gmra.mxu0 %v144
    %v208 = vpop.f32.mrf.mxu0
    %v209 = vadd.f32 %v99, %v208
    %210 = vmatmul.f32.gmra.mxu0 %v147
    %v211 = vpop.f32.mrf.mxu0
    %v212 = vadd.f32 %v99, %v211
    %213 = vdwg.mxu0
    %v214 = vadd.f32 %v167, %v170
    %v215 = vadd.f32 %v214, %v173
    %v216 = vadd.f32 %v215, %v176
    %v217 = vadd.f32 %v216, %v179
    %v218 = vadd.f32 %v217, %v182
    %v219 = vadd.f32 %v218, %v185
    %v220 = vadd.f32 %v219, %v188
    %v221 = vadd.f32 %v220, %v191
    %v222 = vadd.f32 %v221, %v194
    %v223 = vadd.f32 %v222, %v197
    %v224 = vadd.f32 %v223, %v200
    %v225 = vadd.f32 %v224, %v203
    %v226 = vadd.f32 %v225, %v206
    %v227 = vadd.f32 %v226, %v209
    %v228 = vadd.f32 %v227, %v212
    %v229 = vrot.slane %v228, 4
    %v230 = vadd.f32 %v228, %v229
    %v231 = vrot.slane %v230, 2
    %v232 = vadd.f32 %v230, %v231
    %v233 = vrot.slane %v232, 1
    %v234 = vadd.f32 %v232, %v233
    %v235 = vrcp.pop 128.0
    %v236 = vmul.f32 128.0, %v235
    %v237 = vsub.f32 1.0, %v236
    %v238 = vmul.f32 %v235, %v237
    %v239 = vadd.f32 %v235, %v238
    %vm240 = vweird.f32 %v235
    %v241 = vsel %vm240, %v235, %v239
    %v242 = vmul.f32 %v234, %v241
    %v243 = vmul.f32 %v167, %v167
    %v244 = vmul.f32 %v170, %v170
    %v245 = vmul.f32 %v173, %v173
    %v246 = vmul.f32 %v176, %v176
    %v247 = vmul.f32 %v179, %v179
    %v248 = vmul.f32 %v182, %v182
    %v249 = vmul.f32 %v185, %v185
    %v250 = vmul.f32 %v188, %v188
    %v251 = vmul.f32 %v191, %v191
    %v252 = vmul.f32 %v194, %v194
    %v253 = vmul.f32 %v197, %v197
    %v254 = vmul.f32 %v200, %v200
    %v255 = vmul.f32 %v203, %v203
    %v256 = vmul.f32 %v206, %v206
    %v257 = vmul.f32 %v209, %v209
    %v258 = vmul.f32 %v212, %v212
    %v259 = vadd.f32 %v243, %v244
    %v260 = vadd.f32 %v259, %v245
    %v261 = vadd.f32 %v260, %v246
    %v262 = vadd.f32 %v261, %v247
    %v263 = vadd.f32 %v262, %v248
    %v264 = vadd.f32 %v263, %v249
    %v265 = vadd.f32 %v264, %v250
    %v266 = vadd.f32 %v265, %v251
    %v267 = vadd.f32 %v266, %v252
    %v268 = vadd.f32 %v267, %v253
    %v269 = vadd.f32 %v268, %v254
    %v270 = vadd.f32 %v269, %v255
    %v271 = vadd.f32 %v270, %v256
    %v272 = vadd.f32 %v271, %v257
    %v273 = vadd.f32 %v272, %v258
    %v274 = vrot.slane %v273, 4
    %v275 = vadd.f32 %v273, %v274
    %v276 = vrot.slane %v275, 2
    %v277 = vadd.f32 %v275, %v276
    %v278 = vrot.slane %v277, 1
    %v279 = vadd.f32 %v277, %v278
    %v280 = vmul.f32 %v279, %v241
    %v281 = vmul.f32 %v242, %v242
    %v282 = vsub.f32 %v280, %v281
    %v283 = vmax.f32 %v282, 0.0
    %v284 = vsub.f32 %v167, %v242
    %v285 = vsub.f32 %v170, %v242
    %v286 = vsub.f32 %v173, %v242
    %v287 = vsub.f32 %v176, %v242
    %v288 = vsub.f32 %v179, %v242
    %v289 = vsub.f32 %v182, %v242
    %v290 = vsub.f32 %v185, %v242
    %v291 = vsub.f32 %v188, %v242
    %v292 = vsub.f32 %v191, %v242
    %v293 = vsub.f32 %v194, %v242
    %v294 = vsub.f32 %v197, %v242
    %v295 = vsub.f32 %v200, %v242
    %v296 = vsub.f32 %v203, %v242
    %v297 = vsub.f32 %v206, %v242
    %v298 = vsub.f32 %v209, %v242
    %v299 = vsub.f32 %v212, %v242
    %v300 = vadd.f32 %v283, 1e-05
    %v301 = vrsqrt.pop %v300
    %v302 = vmul.f32 %v301, %v300
    %v303 = vmul.f32 %v302, %v301
    %v304 = vmul.f32 0.5, %v303
    %v305 = vsub.f32 1.5, %v304
    %v306 = vmul.f32 %v301, %v305
    %vm307 = vweird.f32 %v300
    %vm308 = vweird.f32 %v301
    %vm309 = vmor %vm307, %vm308
    %v310 = vsel %vm309, %v301, %v306
    %v311 = vmul.f32 %v284, %v310
    %v312 = vmul.f32 %v285, %v310
    %v313 = vmul.f32 %v286, %v310
    %v314 = vmul.f32 %v287, %v310
    %v315 = vmul.f32 %v288, %v310
    %v316 = vmul.f32 %v289, %v310
    %v317 = vmul.f32 %v290, %v310
    %v318 = vmul.f32 %v291, %v310
    %v319 = vmul.f32 %v292, %v310
    %v320 = vmul.f32 %v293, %v310
    %v321 = vmul.f32 %v294, %v310
    %v322 = vmul.f32 %v295, %v310
    %v323 = vmul.f32 %v296, %v310
    %v324 = vmul.f32 %v297, %v310
    %v325 = vmul.f32 %v298, %v310
    %v326 = vmul.f32 %v299, %v310
    %v327 = vperm.slane %v46, 1
    %v328 = vmul.f32 %v311, %v327
    %v329 = vmul.f32 %v312, %v327
    %v330 = vmul.f32 %v313, %v327
    %v331 = vmul.f32 %v314, %v327
    %v332 = vmul.f32 %v315, %v327
    %v333 = vmul.f32 %v316, %v327
    %v334 = vmul.f32 %v317, %v327
    %v335 = vmul.f32 %v318, %v327
    %v336 = vmul.f32 %v319, %v327
    %v337 = vmul.f32 %v320, %v327
    %v338 = vmul.f32 %v321, %v327
    %v339 = vmul.f32 %v322, %v327
    %v340 = vmul.f32 %v323, %v327
    %v341 = vmul.f32 %v324, %v327
    %v342 = vmul.f32 %v325, %v327
    %v343 = vmul.f32 %v326, %v327
    %v344 = vperm.slane %v46, 2
    %v345 = vadd.f32 %v328, %v344
    %v346 = vadd.f32 %v329, %v344
    %v347 = vadd.f32 %v330, %v344
    %v348 = vadd.f32 %v331, %v344
    %v349 = vadd.f32 %v332, %v344
    %v350 = vadd.f32 %v333, %v344
    %v351 = vadd.f32 %v334, %v344
    %v352 = vadd.f32 %v335, %v344
    %v353 = vadd.f32 %v336, %v344
    %v354 = vadd.f32 %v337, %v344
    %v355 = vadd.f32 %v338, %v344
    %v356 = vadd.f32 %v339, %v344
    %v357 = vadd.f32 %v340, %v344
    %v358 = vadd.f32 %v341, %v344
    %v359 = vadd.f32 %v342, %v344
    %v360 = vadd.f32 %v343, %v344
    %v361 = vmax.f32 %v345, 0.0
    %v362 = vmax.f32 %v346, 0.0
    %v363 = vmax.f32 %v347, 0.0
    %v364 = vmax.f32 %v348, 0.0
    %v365 = vmax.f32 %v349, 0.0
    %v366 = vmax.f32 %v350, 0.0
    %v367 = vmax.f32 %v351, 0.0
    %v368 = vmax.f32 %v352, 0.0
    %v369 = vmax.f32 %v353, 0.0
    %v370 = vmax.f32 %v354, 0.0
    %v371 = vmax.f32 %v355, 0.0
    %v372 = vmax.f32 %v356, 0.0
    %v373 = vmax.f32 %v357, 0.0
    %v374 = vmax.f32 %v358, 0.0
    %v375 = vmax.f32 %v359, 0.0
    %v376 = vmax.f32 %v360, 0.0
    %v377 = vperm.slane %v46, 3
    %378 = vmatpush.msra.mxu0 %v66
    %379 = vmatpush.msra.mxu0 %v65
    %380 = vmatpush.msra.mxu0 %v64
    %381 = vmatpush.msra.mxu0 %v63
    %382 = vmatpush.msra.mxu0 %v62
    %383 = vmatpush.msra.mxu0 %v61
    %384 = vmatpush.msra.mxu0 %v60
    %385 = vmatpush.msra.mxu0 %v59
    %386 = vmatpush.msra.mxu0 %v58
    %387 = vmatpush.msra.mxu0 %v57
    %388 = vmatpush.msra.mxu0 %v56
    %389 = vmatpush.msra.mxu0 %v55
    %390 = vmatpush.msra.mxu0 %v54
    %391 = vmatpush.msra.mxu0 %v53
    %392 = vmatpush.msra.mxu0 %v52
    %393 = vmatpush.msra.mxu0 %v51
    %394 = vmatmul.f32.gmra.mxu0 %v361
    %v395 = vpop.f32.mrf.mxu0
    %v396 = vadd.f32 %v377, %v395
    %397 = vmatmul.f32.gmra.mxu0 %v362
    %v398 = vpop.f32.mrf.mxu0
    %v399 = vadd.f32 %v377, %v398
    %400 = vmatmul.f32.gmra.mxu0 %v363
    %v401 = vpop.f32.mrf.mxu0
    %v402 = vadd.f32 %v377, %v401
    %403 = vmatmul.f32.gmra.mxu0 %v364
    %v404 = vpop.f32.mrf.mxu0
    %v405 = vadd.f32 %v377, %v404
    %406 = vmatmul.f32.gmra.mxu0 %v365
    %v407 = vpop.f32.mrf.mxu0
    %v408 = vadd.f32 %v377, %v407
    %409 = vmatmul.f32.gmra.mxu0 %v366
    %v410 = vpop.f32.mrf.mxu0
    %v411 = vadd.f32 %v377, %v410
    %412 = vmatmul.f32.gmra.mxu0 %v367
    %v413 = vpop.f32.mrf.mxu0
    %v414 = vadd.f32 %v377, %v413
    %415 = vmatmul.f32.gmra.mxu0 %v368
    %v416 = vpop.f32.mrf.mxu0
    %v417 = vadd.f32 %v377, %v416
    %418 = vmatmul.f32.gmra.mxu0 %v369
    %v419 = vpop.f32.mrf.mxu0
    %v420 = vadd.f32 %v377, %v419
    %421 = vmatmul.f32.gmra.mxu0 %v370
    %v422 = vpop.f32.mrf.mxu0
    %v423 = vadd.f32 %v377, %v422
    %424 = vmatmul.f32.gmra.mxu0 %v371
    %v425 = vpop.f32.mrf.mxu0
    %v426 = vadd.f32 %v377, %v425
    %427 = vmatmul.f32.gmra.mxu0 %v372
    %v428 = vpop.f32.mrf.mxu0
    %v429 = vadd.f32 %v377, %v428
    %430 = vmatmul.f32.gmra.mxu0 %v373
    %v431 = vpop.f32.mrf.mxu0
    %v432 = vadd.f32 %v377, %v431
    %433 = vmatmul.f32.gmra.mxu0 %v374
    %v434 = vpop.f32.mrf.mxu0
    %v435 = vadd.f32 %v377, %v434
    %436 = vmatmul.f32.gmra.mxu0 %v375
    %v437 = vpop.f32.mrf.mxu0
    %v438 = vadd.f32 %v377, %v437
    %439 = vmatmul.f32.gmra.mxu0 %v376
    %v440 = vpop.f32.mrf.mxu0
    %v441 = vadd.f32 %v377, %v440
    %442 = vdwg.mxu0
    %v443 = vadd.f32 %v396, %v399
    %v444 = vadd.f32 %v443, %v402
    %v445 = vadd.f32 %v444, %v405
    %v446 = vadd.f32 %v445, %v408
    %v447 = vadd.f32 %v446, %v411
    %v448 = vadd.f32 %v447, %v414
    %v449 = vadd.f32 %v448, %v417
    %v450 = vadd.f32 %v449, %v420
    %v451 = vadd.f32 %v450, %v423
    %v452 = vadd.f32 %v451, %v426
    %v453 = vadd.f32 %v452, %v429
    %v454 = vadd.f32 %v453, %v432
    %v455 = vadd.f32 %v454, %v435
    %v456 = vadd.f32 %v455, %v438
    %v457 = vadd.f32 %v456, %v441
    %v458 = vrot.slane %v457, 4
    %v459 = vadd.f32 %v457, %v458
    %v460 = vrot.slane %v459, 2
    %v461 = vadd.f32 %v459, %v460
    %v462 = vrot.slane %v461, 1
    %v463 = vadd.f32 %v461, %v462
    %v464 = vmul.f32 %v463, %v241
    %v465 = vmul.f32 %v396, %v396
    %v466 = vmul.f32 %v399, %v399
    %v467 = vmul.f32 %v402, %v402
    %v468 = vmul.f32 %v405, %v405
    %v469 = vmul.f32 %v408, %v408
    %v470 = vmul.f32 %v411, %v411
    %v471 = vmul.f32 %v414, %v414
    %v472 = vmul.f32 %v417, %v417
    %v473 = vmul.f32 %v420, %v420
    %v474 = vmul.f32 %v423, %v423
    %v475 = vmul.f32 %v426, %v426
    %v476 = vmul.f32 %v429, %v429
    %v477 = vmul.f32 %v432, %v432
    %v478 = vmul.f32 %v435, %v435
    %v479 = vmul.f32 %v438, %v438
    %v480 = vmul.f32 %v441, %v441
    %v481 = vadd.f32 %v465, %v466
    %v482 = vadd.f32 %v481, %v467
    %v483 = vadd.f32 %v482, %v468
    %v484 = vadd.f32 %v483, %v469
    %v485 = vadd.f32 %v484, %v470
    %v486 = vadd.f32 %v485, %v471
    %v487 = vadd.f32 %v486, %v472
    %v488 = vadd.f32 %v487, %v473
    %v489 = vadd.f32 %v488, %v474
    %v490 = vadd.f32 %v489, %v475
    %v491 = vadd.f32 %v490, %v476
    %v492 = vadd.f32 %v491, %v477
    %v493 = vadd.f32 %v492, %v478
    %v494 = vadd.f32 %v493, %v479
    %v495 = vadd.f32 %v494, %v480
    %v496 = vrot.slane %v495, 4
    %v497 = vadd.f32 %v495, %v496
    %v498 = vrot.slane %v497, 2
    %v499 = vadd.f32 %v497, %v498
    %v500 = vrot.slane %v499, 1
    %v501 = vadd.f32 %v499, %v500
    %v502 = vmul.f32 %v501, %v241
    %v503 = vmul.f32 %v464, %v464
    %v504 = vsub.f32 %v502, %v503
    %v505 = vmax.f32 %v504, 0.0
    %v506 = vsub.f32 %v396, %v464
    %v507 = vsub.f32 %v399, %v464
    %v508 = vsub.f32 %v402, %v464
    %v509 = vsub.f32 %v405, %v464
    %v510 = vsub.f32 %v408, %v464
    %v511 = vsub.f32 %v411, %v464
    %v512 = vsub.f32 %v414, %v464
    %v513 = vsub.f32 %v417, %v464
    %v514 = vsub.f32 %v420, %v464
    %v515 = vsub.f32 %v423, %v464
    %v516 = vsub.f32 %v426, %v464
    %v517 = vsub.f32 %v429, %v464
    %v518 = vsub.f32 %v432, %v464
    %v519 = vsub.f32 %v435, %v464
    %v520 = vsub.f32 %v438, %v464
    %v521 = vsub.f32 %v441, %v464
    %v522 = vadd.f32 %v505, 1e-05
    %v523 = vrsqrt.pop %v522
    %v524 = vmul.f32 %v523, %v522
    %v525 = vmul.f32 %v524, %v523
    %v526 = vmul.f32 0.5, %v525
    %v527 = vsub.f32 1.5, %v526
    %v528 = vmul.f32 %v523, %v527
    %vm529 = vweird.f32 %v522
    %vm530 = vweird.f32 %v523
    %vm531 = vmor %vm529, %vm530
    %v532 = vsel %vm531, %v523, %v528
    %v533 = vmul.f32 %v506, %v532
    %v534 = vmul.f32 %v507, %v532
    %v535 = vmul.f32 %v508, %v532
    %v536 = vmul.f32 %v509, %v532
    %v537 = vmul.f32 %v510, %v532
    %v538 = vmul.f32 %v511, %v532
    %v539 = vmul.f32 %v512, %v532
    %v540 = vmul.f32 %v513, %v532
    %v541 = vmul.f32 %v514, %v532
    %v542 = vmul.f32 %v515, %v532
    %v543 = vmul.f32 %v516, %v532
    %v544 = vmul.f32 %v517, %v532
    %v545 = vmul.f32 %v518, %v532
    %v546 = vmul.f32 %v519, %v532
    %v547 = vmul.f32 %v520, %v532
    %v548 = vmul.f32 %v521, %v532
    %v549 = vperm.slane %v46, 4
    %v550 = vmul.f32 %v533, %v549
    %v551 = vmul.f32 %v534, %v549
    %v552 = vmul.f32 %v535, %v549
    %v553 = vmul.f32 %v536, %v549
    %v554 = vmul.f32 %v537, %v549
    %v555 = vmul.f32 %v538, %v549
    %v556 = vmul.f32 %v539, %v549
    %v557 = vmul.f32 %v540, %v549
    %v558 = vmul.f32 %v541, %v549
    %v559 = vmul.f32 %v542, %v549
    %v560 = vmul.f32 %v543, %v549
    %v561 = vmul.f32 %v544, %v549
    %v562 = vmul.f32 %v545, %v549
    %v563 = vmul.f32 %v546, %v549
    %v564 = vmul.f32 %v547, %v549
    %v565 = vmul.f32 %v548, %v549
    %v566 = vperm.slane %v46, 5
    %v567 = vadd.f32 %v550, %v566
    %v568 = vadd.f32 %v551, %v566
    %v569 = vadd.f32 %v552, %v566
    %v570 = vadd.f32 %v553, %v566
    %v571 = vadd.f32 %v554, %v566
    %v572 = vadd.f32 %v555, %v566
    %v573 = vadd.f32 %v556, %v566
    %v574 = vadd.f32 %v557, %v566
    %v575 = vadd.f32 %v558, %v566
    %v576 = vadd.f32 %v559, %v566
    %v577 = vadd.f32 %v560, %v566
    %v578 = vadd.f32 %v561, %v566
    %v579 = vadd.f32 %v562, %v566
    %v580 = vadd.f32 %v563, %v566
    %v581 = vadd.f32 %v564, %v566
    %v582 = vadd.f32 %v565, %v566
    %v583 = vmax.f32 %v567, 0.0
    %v584 = vmax.f32 %v568, 0.0
    %v585 = vmax.f32 %v569, 0.0
    %v586 = vmax.f32 %v570, 0.0
    %v587 = vmax.f32 %v571, 0.0
    %v588 = vmax.f32 %v572, 0.0
    %v589 = vmax.f32 %v573, 0.0
    %v590 = vmax.f32 %v574, 0.0
    %v591 = vmax.f32 %v575, 0.0
    %v592 = vmax.f32 %v576, 0.0
    %v593 = vmax.f32 %v577, 0.0
    %v594 = vmax.f32 %v578, 0.0
    %v595 = vmax.f32 %v579, 0.0
    %v596 = vmax.f32 %v580, 0.0
    %v597 = vmax.f32 %v581, 0.0
    %v598 = vmax.f32 %v582, 0.0
    %v599 = vperm.slane %v46, 6
    %600 = vmatpush.msra.mxu0 %v82
    %601 = vmatpush.msra.mxu0 %v81
    %602 = vmatpush.msra.mxu0 %v80
    %603 = vmatpush.msra.mxu0 %v79
    %604 = vmatpush.msra.mxu0 %v78
    %605 = vmatpush.msra.mxu0 %v77
    %606 = vmatpush.msra.mxu0 %v76
    %607 = vmatpush.msra.mxu0 %v75
    %608 = vmatpush.msra.mxu0 %v74
    %609 = vmatpush.msra.mxu0 %v73
    %610 = vmatpush.msra.mxu0 %v72
    %611 = vmatpush.msra.mxu0 %v71
    %612 = vmatpush.msra.mxu0 %v70
    %613 = vmatpush.msra.mxu0 %v69
    %614 = vmatpush.msra.mxu0 %v68
    %615 = vmatpush.msra.mxu0 %v67
    %616 = vmatmul.f32.gmra.mxu0 %v583
    %v617 = vpop.f32.mrf.mxu0
    %v618 = vadd.f32 %v599, %v617
    %619 = vmatmul.f32.gmra.mxu0 %v584
    %v620 = vpop.f32.mrf.mxu0
    %v621 = vadd.f32 %v599, %v620
    %622 = vmatmul.f32.gmra.mxu0 %v585
    %v623 = vpop.f32.mrf.mxu0
    %v624 = vadd.f32 %v599, %v623
    %625 = vmatmul.f32.gmra.mxu0 %v586
    %v626 = vpop.f32.mrf.mxu0
    %v627 = vadd.f32 %v599, %v626
    %628 = vmatmul.f32.gmra.mxu0 %v587
    %v629 = vpop.f32.mrf.mxu0
    %v630 = vadd.f32 %v599, %v629
    %631 = vmatmul.f32.gmra.mxu0 %v588
    %v632 = vpop.f32.mrf.mxu0
    %v633 = vadd.f32 %v599, %v632
    %634 = vmatmul.f32.gmra.mxu0 %v589
    %v635 = vpop.f32.mrf.mxu0
    %v636 = vadd.f32 %v599, %v635
    %637 = vmatmul.f32.gmra.mxu0 %v590
    %v638 = vpop.f32.mrf.mxu0
    %v639 = vadd.f32 %v599, %v638
    %640 = vmatmul.f32.gmra.mxu0 %v591
    %v641 = vpop.f32.mrf.mxu0
    %v642 = vadd.f32 %v599, %v641
    %643 = vmatmul.f32.gmra.mxu0 %v592
    %v644 = vpop.f32.mrf.mxu0
    %v645 = vadd.f32 %v599, %v644
    %646 = vmatmul.f32.gmra.mxu0 %v593
    %v647 = vpop.f32.mrf.mxu0
    %v648 = vadd.f32 %v599, %v647
    %649 = vmatmul.f32.gmra.mxu0 %v594
    %v650 = vpop.f32.mrf.mxu0
    %v651 = vadd.f32 %v599, %v650
    %652 = vmatmul.f32.gmra.mxu0 %v595
    %v653 = vpop.f32.mrf.mxu0
    %v654 = vadd.f32 %v599, %v653
    %655 = vmatmul.f32.gmra.mxu0 %v596
    %v656 = vpop.f32.mrf.mxu0
    %v657 = vadd.f32 %v599, %v656
    %658 = vmatmul.f32.gmra.mxu0 %v597
    %v659 = vpop.f32.mrf.mxu0
    %v660 = vadd.f32 %v599, %v659
    %661 = vmatmul.f32.gmra.mxu0 %v598
    %v662 = vpop.f32.mrf.mxu0
    %v663 = vadd.f32 %v599, %v662
    %664 = vdwg.mxu0
    %v665 = vmax.f32 %v618, 0.0
    %v666 = vmax.f32 %v621, 0.0
    %v667 = vmax.f32 %v624, 0.0
    %v668 = vmax.f32 %v627, 0.0
    %v669 = vmax.f32 %v630, 0.0
    %v670 = vmax.f32 %v633, 0.0
    %v671 = vmax.f32 %v636, 0.0
    %v672 = vmax.f32 %v639, 0.0
    %v673 = vmax.f32 %v642, 0.0
    %v674 = vmax.f32 %v645, 0.0
    %v675 = vmax.f32 %v648, 0.0
    %v676 = vmax.f32 %v651, 0.0
    %v677 = vmax.f32 %v654, 0.0
    %v678 = vmax.f32 %v657, 0.0
    %v679 = vmax.f32 %v660, 0.0
    %v680 = vmax.f32 %v663, 0.0
    %v681 = vperm.slane %v46, 7
    %682 = vmatpush.msra.mxu0 %v98
    %683 = vmatpush.msra.mxu0 %v97
    %684 = vmatpush.msra.mxu0 %v96
    %685 = vmatpush.msra.mxu0 %v95
    %686 = vmatpush.msra.mxu0 %v94
    %687 = vmatpush.msra.mxu0 %v93
    %688 = vmatpush.msra.mxu0 %v92
    %689 = vmatpush.msra.mxu0 %v91
    %690 = vmatpush.msra.mxu0 %v90
    %691 = vmatpush.msra.mxu0 %v89
    %692 = vmatpush.msra.mxu0 %v88
    %693 = vmatpush.msra.mxu0 %v87
    %694 = vmatpush.msra.mxu0 %v86
    %695 = vmatpush.msra.mxu0 %v85
    %696 = vmatpush.msra.mxu0 %v84
    %697 = vmatpush.msra.mxu0 %v83
    %698 = vmatmul.f32.gmra.mxu0 %v665
    %v699 = vpop.f32.mrf.mxu0
    %v700 = vadd.f32 %v681, %v699
    %701 = vmatmul.f32.gmra.mxu0 %v666
    %v702 = vpop.f32.mrf.mxu0
    %v703 = vadd.f32 %v681, %v702
    %704 = vmatmul.f32.gmra.mxu0 %v667
    %v705 = vpop.f32.mrf.mxu0
    %v706 = vadd.f32 %v681, %v705
    %707 = vmatmul.f32.gmra.mxu0 %v668
    %v708 = vpop.f32.mrf.mxu0
    %v709 = vadd.f32 %v681, %v708
    %710 = vmatmul.f32.gmra.mxu0 %v669
    %v711 = vpop.f32.mrf.mxu0
    %v712 = vadd.f32 %v681, %v711
    %713 = vmatmul.f32.gmra.mxu0 %v670
    %v714 = vpop.f32.mrf.mxu0
    %v715 = vadd.f32 %v681, %v714
    %716 = vmatmul.f32.gmra.mxu0 %v671
    %v717 = vpop.f32.mrf.mxu0
    %v718 = vadd.f32 %v681, %v717
    %719 = vmatmul.f32.gmra.mxu0 %v672
    %v720 = vpop.f32.mrf.mxu0
    %v721 = vadd.f32 %v681, %v720
    %722 = vmatmul.f32.gmra.mxu0 %v673
    %v723 = vpop.f32.mrf.mxu0
    %v724 = vadd.f32 %v681, %v723
    %725 = vmatmul.f32.gmra.mxu0 %v674
    %v726 = vpop.f32.mrf.mxu0
    %v727 = vadd.f32 %v681, %v726
    %728 = vmatmul.f32.gmra.mxu0 %v675
    %v729 = vpop.f32.mrf.mxu0
    %v730 = vadd.f32 %v681, %v729
    %731 = vmatmul.f32.gmra.mxu0 %v676
    %v732 = vpop.f32.mrf.mxu0
    %v733 = vadd.f32 %v681, %v732
    %734 = vmatmul.f32.gmra.mxu0 %v677
    %v735 = vpop.f32.mrf.mxu0
    %v736 = vadd.f32 %v681, %v735
    %737 = vmatmul.f32.gmra.mxu0 %v678
    %v738 = vpop.f32.mrf.mxu0
    %v739 = vadd.f32 %v681, %v738
    %740 = vmatmul.f32.gmra.mxu0 %v679
    %v741 = vpop.f32.mrf.mxu0
    %v742 = vadd.f32 %v681, %v741
    %743 = vmatmul.f32.gmra.mxu0 %v680
    %v744 = vpop.f32.mrf.mxu0
    %v745 = vadd.f32 %v681, %v744
    %746 = vdwg.mxu0
    %748 = vset.pattern.permute.xlu0 9
    %749 = vperm.xlu0 %748, %v700
    %v750 = vpop.permute.xlu0 %749
    %753 = vset.pattern.permute.xlu0 9
    %754 = vperm.xlu0 %753, %v703
    %v755 = vpop.permute.xlu0 %754
    %758 = vset.pattern.permute.xlu0 9
    %759 = vperm.xlu0 %758, %v706
    %v760 = vpop.permute.xlu0 %759
    %763 = vset.pattern.permute.xlu0 9
    %764 = vperm.xlu0 %763, %v709
    %v765 = vpop.permute.xlu0 %764
    %768 = vset.pattern.permute.xlu0 9
    %769 = vperm.xlu0 %768, %v712
    %v770 = vpop.permute.xlu0 %769
    %773 = vset.pattern.permute.xlu0 9
    %774 = vperm.xlu0 %773, %v715
    %v775 = vpop.permute.xlu0 %774
    %778 = vset.pattern.permute.xlu0 9
    %779 = vperm.xlu0 %778, %v718
    %v780 = vpop.permute.xlu0 %779
    %783 = vset.pattern.permute.xlu0 9
    %784 = vperm.xlu0 %783, %v721
    %v785 = vpop.permute.xlu0 %784
    %788 = vset.pattern.permute.xlu0 9
    %789 = vperm.xlu0 %788, %v724
    %v790 = vpop.permute.xlu0 %789
    %793 = vset.pattern.permute.xlu0 9
    %794 = vperm.xlu0 %793, %v727
    %v795 = vpop.permute.xlu0 %794
    %798 = vset.pattern.permute.xlu0 9
    %799 = vperm.xlu0 %798, %v730
    %v800 = vpop.permute.xlu0 %799
    %803 = vset.pattern.permute.xlu0 9
    %804 = vperm.xlu0 %803, %v733
    %v805 = vpop.permute.xlu0 %804
    %808 = vset.pattern.permute.xlu0 9
    %809 = vperm.xlu0 %808, %v736
    %v810 = vpop.permute.xlu0 %809
    %813 = vset.pattern.permute.xlu0 9
    %814 = vperm.xlu0 %813, %v739
    %v815 = vpop.permute.xlu0 %814
    %818 = vset.pattern.permute.xlu0 9
    %819 = vperm.xlu0 %818, %v742
    %v820 = vpop.permute.xlu0 %819
    %823 = vset.pattern.permute.xlu0 9
    %824 = vperm.xlu0 %823, %v745
    %v825 = vpop.permute.xlu0 %824
    %v827 = vsub.f32 %v700, %v750
    %v828 = vsub.f32 %v703, %v755
    %v829 = vsub.f32 %v706, %v760
    %v830 = vsub.f32 %v709, %v765
    %v831 = vsub.f32 %v712, %v770
    %v832 = vsub.f32 %v715, %v775
    %v833 = vsub.f32 %v718, %v780
    %v834 = vsub.f32 %v721, %v785
    %v835 = vsub.f32 %v724, %v790
    %v836 = vsub.f32 %v727, %v795
    %v837 = vsub.f32 %v730, %v800
    %v838 = vsub.f32 %v733, %v805
    %v839 = vsub.f32 %v736, %v810
    %v840 = vsub.f32 %v739, %v815
    %v841 = vsub.f32 %v742, %v820
    %v842 = vsub.f32 %v745, %v825
    %843 = vset.pattern.permute.xlu0 0
    %844 = vperm.xlu0 %843, %v700
    %v845 = vpop.permute.xlu0 %844
    %847 = vset.pattern.permute.xlu0 0
    %848 = vperm.xlu0 %847, %v703
    %v849 = vpop.permute.xlu0 %848
    %851 = vset.pattern.permute.xlu0 0
    %852 = vperm.xlu0 %851, %v706
    %v853 = vpop.permute.xlu0 %852
    %855 = vset.pattern.permute.xlu0 0
    %856 = vperm.xlu0 %855, %v709
    %v857 = vpop.permute.xlu0 %856
    %859 = vset.pattern.permute.xlu0 0
    %860 = vperm.xlu0 %859, %v712
    %v861 = vpop.permute.xlu0 %860
    %863 = vset.pattern.permute.xlu0 0
    %864 = vperm.xlu0 %863, %v715
    %v865 = vpop.permute.xlu0 %864
    %867 = vset.pattern.permute.xlu0 0
    %868 = vperm.xlu0 %867, %v718
    %v869 = vpop.permute.xlu0 %868
    %871 = vset.pattern.permute.xlu0 0
    %872 = vperm.xlu0 %871, %v721
    %v873 = vpop.permute.xlu0 %872
    %875 = vset.pattern.permute.xlu0 0
    %876 = vperm.xlu0 %875, %v724
    %v877 = vpop.permute.xlu0 %876
    %879 = vset.pattern.permute.xlu0 0
    %880 = vperm.xlu0 %879, %v727
    %v881 = vpop.permute.xlu0 %880
    %883 = vset.pattern.permute.xlu0 0
    %884 = vperm.xlu0 %883, %v730
    %v885 = vpop.permute.xlu0 %884
    %887 = vset.pattern.permute.xlu0 0
    %888 = vperm.xlu0 %887, %v733
    %v889 = vpop.permute.xlu0 %888
    %891 = vset.pattern.permute.xlu0 0
    %892 = vperm.xlu0 %891, %v736
    %v893 = vpop.permute.xlu0 %892
    %895 = vset.pattern.permute.xlu0 0
    %896 = vperm.xlu0 %895, %v739
    %v897 = vpop.permute.xlu0 %896
    %899 = vset.pattern.permute.xlu0 0
    %900 = vperm.xlu0 %899, %v742
    %v901 = vpop.permute.xlu0 %900
    %903 = vset.pattern.permute.xlu0 0
    %904 = vperm.xlu0 %903, %v745
    %v905 = vpop.permute.xlu0 %904
    %v907 = vadd.f32 %v845, %v827
    %v908 = vadd.f32 %v849, %v828
    %v909 = vadd.f32 %v853, %v829
    %v910 = vadd.f32 %v857, %v830
    %v911 = vadd.f32 %v861, %v831
    %v912 = vadd.f32 %v865, %v832
    %v913 = vadd.f32 %v869, %v833
    %v914 = vadd.f32 %v873, %v834
    %v915 = vadd.f32 %v877, %v835
    %v916 = vadd.f32 %v881, %v836
    %v917 = vadd.f32 %v885, %v837
    %v918 = vadd.f32 %v889, %v838
    %v919 = vadd.f32 %v893, %v839
    %v920 = vadd.f32 %v897, %v840
    %v921 = vadd.f32 %v901, %v841
    %v922 = vadd.f32 %v905, %v842
    %939 = vrot.lane.b32.xlu0 %v907, 127
    %v940 = vpop.permute.xlu0 %939
    %941 = vrot.lane.b32.xlu0 %v908, 127
    %v942 = vpop.permute.xlu0 %941
    %943 = vrot.lane.b32.xlu0 %v909, 127
    %v944 = vpop.permute.xlu0 %943
    %945 = vrot.lane.b32.xlu0 %v910, 127
    %v946 = vpop.permute.xlu0 %945
    %947 = vrot.lane.b32.xlu0 %v911, 127
    %v948 = vpop.permute.xlu0 %947
    %949 = vrot.lane.b32.xlu0 %v912, 127
    %v950 = vpop.permute.xlu0 %949
    %951 = vrot.lane.b32.xlu0 %v913, 127
    %v952 = vpop.permute.xlu0 %951
    %953 = vrot.lane.b32.xlu0 %v914, 127
    %v954 = vpop.permute.xlu0 %953
    %955 = vrot.lane.b32.xlu0 %v915, 127
    %v956 = vpop.permute.xlu0 %955
    %957 = vrot.lane.b32.xlu0 %v916, 127
    %v958 = vpop.permute.xlu0 %957
    %959 = vrot.lane.b32.xlu0 %v917, 127
    %v960 = vpop.permute.xlu0 %959
    %961 = vrot.lane.b32.xlu0 %v918, 127
    %v962 = vpop.permute.xlu0 %961
    %963 = vrot.lane.b32.xlu0 %v919, 127
    %v964 = vpop.permute.xlu0 %963
    %965 = vrot.lane.b32.xlu0 %v920, 127
    %v966 = vpop.permute.xlu0 %965
    %967 = vrot.lane.b32.xlu0 %v921, 127
    %v968 = vpop.permute.xlu0 %967
    %969 = vrot.lane.b32.xlu0 %v922, 127
    %v970 = vpop.permute.xlu0 %969
    %vm987 = vcmask 64512
    %988 = vst.msk [vmem:[%s3] sm:$0xff] %vm987, %v940
    %989 = vst.msk [vmem:[%s3 + $0x8] sm:$0xff] %vm987, %v942
    %990 = vst.msk [vmem:[%s3 + $0x10] sm:$0xff] %vm987, %v944
    %991 = vst.msk [vmem:[%s3 + $0x18] sm:$0xff] %vm987, %v946
    %992 = vst.msk [vmem:[%s3 + $0x20] sm:$0xff] %vm987, %v948
    %993 = vst.msk [vmem:[%s3 + $0x28] sm:$0xff] %vm987, %v950
    %994 = vst.msk [vmem:[%s3 + $0x30] sm:$0xff] %vm987, %v952
    %995 = vst.msk [vmem:[%s3 + $0x38] sm:$0xff] %vm987, %v954
    %996 = vst.msk [vmem:[%s3 + $0x40] sm:$0xff] %vm987, %v956
    %997 = vst.msk [vmem:[%s3 + $0x48] sm:$0xff] %vm987, %v958
    %998 = vst.msk [vmem:[%s3 + $0x50] sm:$0xff] %vm987, %v960
    %999 = vst.msk [vmem:[%s3 + $0x58] sm:$0xff] %vm987, %v962
    %1000 = vst.msk [vmem:[%s3 + $0x60] sm:$0xff] %vm987, %v964
    %1001 = vst.msk [vmem:[%s3 + $0x68] sm:$0xff] %vm987, %v966
    %1002 = vst.msk [vmem:[%s3 + $0x70] sm:$0xff] %vm987, %v968
    %1003 = vst.msk [vmem:[%s3 + $0x78] sm:$0xff] %vm987, %v970
    // Predicated region
    $region18: #{tpu_custom_call.1} parent=1 // pred_check
      _
    $region19: #{tpu_custom_call.1} parent=1 // pred_check_branch
      %1005 = sbr.rel (0) target = $region21
    $region20: #{tpu_custom_call.1} parent=1 // pred_region
      _
    $region21: #{tpu_custom_call.1} parent=1 // pred_fallthru
      _
    // Predicated region
    $region22: #{tpu_custom_call.1} parent=1 // pred_check
      _
    $region23: #{tpu_custom_call.1} parent=1 // pred_check_branch
      %1007 = sbr.rel (0) target = $region25
    $region24: #{tpu_custom_call.1} parent=1 // pred_region
      _
    $region25: #{tpu_custom_call.1} parent=1 // pred_fallthru
      _
    %1008 = vsyncpa [#allocation3], 1

</llo_original>
